<compile_context>
chip_gen: v7x
topology: tpu7x:2x2x1
jax: 0.10.0
libtpu: 0.0.40
codegen_flags: <defaults>
</compile_context>

<pallas_src>
import functools

import jax
import jax.numpy as jnp
from jax.experimental import pallas as pl
from jax.experimental.pallas import tpu as pltpu

# Logical sizes (match nn.Linear(100, 200) and nn.Linear(200, 10)).
D_IN, D_HID, D_OUT = 100, 200, 10
# Lane-dense padded sizes (multiples of 128).
PD_IN, PD_HID, PD_OUT = 128, 256, 128

FUSED_MAX_BATCH = 256   # above this, switch to the batch-tiled two-pass path
TILE_M = 512            # batch tile for the tiled path (multiple of 8)


# --------------------------------------------------------------------------
# Small-batch fused path: whole forward in one gridless kernel (f32, exact).
# --------------------------------------------------------------------------
def _fused_kernel(x_ref, w1_ref, b1_ref, w2_ref, b2_ref, o_ref, xp_ref):
    b = x_ref.shape[0]
    # Fold the 100 -> 128 lane padding into the kernel (no wrapper pad op):
    # zero the 28 padded lanes, drop x into the first 100.
    xp_ref[:, D_IN:] = jnp.zeros((b, PD_IN - D_IN), jnp.float32)
    xp_ref[:, :D_IN] = x_ref[...]
    h = jnp.dot(xp_ref[...], w1_ref[...],
                preferred_element_type=jnp.float32) + b1_ref[...]      # (B, 256)
    h = jnp.maximum(h, 0.0)                                            # ReLU
    logits = jnp.dot(h, w2_ref[...],
                     preferred_element_type=jnp.float32) + b2_ref[...] # (B, 128)
    # Softmax over dim=0 (batch axis), as in nn.Softmax(dim=0). Padded output
    # columns carry all-zero logits -> harmless uniform softmax, sliced later.
    m = jnp.max(logits, axis=0, keepdims=True)
    e = jnp.exp(logits - m)
    s = jnp.sum(e, axis=0, keepdims=True)
    o_ref[...] = e / s            # exact divide (approx recip not worth it)


def _fused_forward(x, p):
    b = x.shape[0]
    vmem = pl.BlockSpec(memory_space=pltpu.MemorySpace.VMEM)
    cost = pl.CostEstimate(
        flops=2 * b * (PD_IN * PD_HID + PD_HID * PD_OUT),
        transcendentals=b * PD_OUT,
        bytes_accessed=4 * (b * D_IN + PD_IN * PD_HID + PD_HID
                            + PD_HID * PD_OUT + PD_OUT + b * PD_OUT),
    )
    out = pl.pallas_call(
        _fused_kernel,
        out_shape=jax.ShapeDtypeStruct((b, PD_OUT), jnp.float32),
        in_specs=[vmem, vmem, vmem, vmem, vmem],
        out_specs=vmem,
        scratch_shapes=[pltpu.VMEM((b, PD_IN), jnp.float32)],
        cost_estimate=cost,
    )(x, p["w1_f32"], p["b1"], p["w2_f32"], p["b2"])
    # Lane-dense store inside, cheap (fusable) slice outside.
    return out[:, :D_OUT]


# --------------------------------------------------------------------------
# Large-batch tiled path: grid over batch tiles, bf16 MXU inputs, resident
# weights, two-pass softmax over dim=0.
# --------------------------------------------------------------------------
def _logits_stats_kernel(x_ref, w1_ref, b1_ref, w2_ref, b2_ref,
                         logits_ref, m_ref, l_ref, xp_ref, *, batch):
    i = pl.program_id(0)
    # In-kernel lane padding of the x tile (bf16).
    xp_ref[:, D_IN:] = jnp.zeros((TILE_M, PD_IN - D_IN), jnp.bfloat16)
    xp_ref[:, :D_IN] = x_ref[...]
    h = jnp.dot(xp_ref[...], w1_ref[...],
                preferred_element_type=jnp.float32) + b1_ref[...]       # (TM, 256)
    h = jnp.maximum(h, 0.0).astype(jnp.bfloat16)
    logits = jnp.dot(h, w2_ref[...],
                     preferred_element_type=jnp.float32) + b2_ref[...]  # (TM, 128)
    logits_ref[...] = logits
    # Per-tile column max / sum-exp for the dim-0 softmax. Rows >= batch (only
    # in the last, partial tile) are masked out so padding never corrupts the
    # normalization statistics.
    rows = jax.lax.broadcasted_iota(jnp.int32, (TILE_M, PD_OUT), 0) + i * TILE_M
    masked = jnp.where(rows < batch, logits, -jnp.inf)
    tile_m = jnp.max(masked, axis=0, keepdims=True)                     # (1, 128)
    tile_l = jnp.sum(jnp.exp(masked - tile_m), axis=0, keepdims=True)   # (1, 128)
    m_ref[0] = jnp.broadcast_to(tile_m, (8, PD_OUT))
    l_ref[0] = jnp.broadcast_to(tile_l, (8, PD_OUT))


def _normalize_kernel(logits_ref, m_ref, l_ref, o_ref):
    o_ref[...] = jnp.exp(logits_ref[...] - m_ref[...]) / l_ref[...]


def _tiled_forward(x, p):
    b = x.shape[0]
    nt = pl.cdiv(b, TILE_M)
    x_bf = x.astype(jnp.bfloat16)   # halves x HBM traffic into pass 1

    kernel1 = functools.partial(_logits_stats_kernel, batch=b)
    logits, m_t, l_t = pl.pallas_call(
        kernel1,
        grid=(nt,),
        out_shape=(
            jax.ShapeDtypeStruct((b, PD_OUT), jnp.float32),
            jax.ShapeDtypeStruct((nt, 8, PD_OUT), jnp.float32),
            jax.ShapeDtypeStruct((nt, 8, PD_OUT), jnp.float32),
        ),
        in_specs=[
            pl.BlockSpec((TILE_M, D_IN), lambda i: (i, 0)),
            pl.BlockSpec((PD_IN, PD_HID), lambda i: (0, 0)),   # resident weights
            pl.BlockSpec((1, PD_HID), lambda i: (0, 0)),
            pl.BlockSpec((PD_HID, PD_OUT), lambda i: (0, 0)),
            pl.BlockSpec((1, PD_OUT), lambda i: (0, 0)),
        ],
        out_specs=(
            pl.BlockSpec((TILE_M, PD_OUT), lambda i: (i, 0)),
            pl.BlockSpec((1, 8, PD_OUT), lambda i: (i, 0, 0)),
            pl.BlockSpec((1, 8, PD_OUT), lambda i: (i, 0, 0)),
        ),
        scratch_shapes=[pltpu.VMEM((TILE_M, PD_IN), jnp.bfloat16)],
        compiler_params=pltpu.CompilerParams(
            dimension_semantics=("parallel",)),   # 2x on v7x (2 TCs); free elsewhere
    )(x_bf, p["w1_bf16"], p["b1"], p["w2_bf16"], p["b2"])

    # Tiny (nt, 128) cross-tile combine in plain JAX: global column max and
    # rescaled sum-exp.
    m_tile = m_t[:, 0, :]
    l_tile = l_t[:, 0, :]
    m_g = jnp.max(m_tile, axis=0, keepdims=True)                          # (1, 128)
    l_g = jnp.sum(l_tile * jnp.exp(m_tile - m_g), axis=0, keepdims=True)  # (1, 128)

    out = pl.pallas_call(
        _normalize_kernel,
        grid=(nt,),
        out_shape=jax.ShapeDtypeStruct((b, PD_OUT), jnp.float32),
        in_specs=[
            pl.BlockSpec((TILE_M, PD_OUT), lambda i: (i, 0)),
            pl.BlockSpec((1, PD_OUT), lambda i: (0, 0)),
            pl.BlockSpec((1, PD_OUT), lambda i: (0, 0)),
        ],
        out_specs=pl.BlockSpec((TILE_M, PD_OUT), lambda i: (i, 0)),
        compiler_params=pltpu.CompilerParams(
            dimension_semantics=("parallel",)),
    )(logits, m_g, l_g)
    return out[:, :D_OUT]


@jax.jit
def base_model_forward(x, params):
    """x: (B, 100) f32 -> (B, 10) f32; softmax taken over dim=0 (batch)."""
    if x.shape[0] <= FUSED_MAX_BATCH:
        return _fused_forward(x, params)
    return _tiled_forward(x, params)


# --------------------------------------------------------------------------
# Parameter construction (one-time, outside the hot path).
# --------------------------------------------------------------------------
def init_params(key):
    """Deterministic init mimicking nn.Linear's uniform(-1/sqrt(fan_in), ...)."""
    k1, k2, k3, k4 = jax.random.split(key, 4)
    bound1 = 1.0 / jnp.sqrt(float(D_IN))
    bound2 = 1.0 / jnp.sqrt(float(D_HID))
    # stored already transposed to (in, out) for the kernels
    w1 = jax.random.uniform(k1, (D_IN, D_HID), jnp.float32, -bound1, bound1)
    b1 = jax.random.uniform(k2, (1, D_HID), jnp.float32, -bound1, bound1)
    w2 = jax.random.uniform(k3, (D_HID, D_OUT), jnp.float32, -bound2, bound2)
    b2 = jax.random.uniform(k4, (1, D_OUT), jnp.float32, -bound2, bound2)
    return w1, b1, w2, b2


def prepare_params(w1, b1, w2, b2):
    """Zero-pad lane dims to multiples of 128 once; keep f32 copies for the
    small fused path and bf16 weight copies for the large-batch tiled path."""
    w1p = jnp.zeros((PD_IN, PD_HID), jnp.float32).at[:D_IN, :D_HID].set(w1)
    b1p = jnp.zeros((1, PD_HID), jnp.float32).at[:, :D_HID].set(b1)
    w2p = jnp.zeros((PD_HID, PD_OUT), jnp.float32).at[:D_HID, :D_OUT].set(w2)
    b2p = jnp.zeros((1, PD_OUT), jnp.float32).at[:, :D_OUT].set(b2)
    return {
        "w1_f32": w1p, "w2_f32": w2p,
        "w1_bf16": w1p.astype(jnp.bfloat16), "w2_bf16": w2p.astype(jnp.bfloat16),
        "b1": b1p, "b2": b2p,
    }


if __name__ == "__main__":
    key = jax.random.PRNGKey(0)
    k_x, k_p, k_x2 = jax.random.split(key, 3)
    w1, b1, w2, b2 = init_params(k_p)
    params = prepare_params(w1, b1, w2, b2)

    def reference(xv):
        h = jnp.maximum(xv @ w1 + b1, 0.0)
        return jax.nn.softmax(h @ w2 + b2, axis=0)

    # --- small-batch fused path (required demo) ---
    B = 8
    x = jax.random.normal(k_x, (B, D_IN), jnp.float32)
    out = jax.block_until_ready(base_model_forward(x, params))
    assert out.shape == (B, D_OUT)
    # softmax over dim=0 -> every column sums to 1
    assert jnp.allclose(jnp.sum(out, axis=0), 1.0, atol=1e-4)
    assert jnp.allclose(out, reference(x), atol=1e-4, rtol=1e-4)

    # --- large-batch tiled path (grid over batch tiles, bf16 matmuls,
    #     two-pass dim-0 softmax); uneven B exercises the row masking ---
    B2 = 1000
    x2 = jax.random.normal(k_x2, (B2, D_IN), jnp.float32)
    out2 = jax.block_until_ready(base_model_forward(x2, params))
    assert out2.shape == (B2, D_OUT)
    assert jnp.allclose(jnp.sum(out2, axis=0), 1.0, atol=1e-3)
    assert jnp.allclose(out2, reference(x2), atol=1e-4, rtol=1e-1)  # bf16 inputs

    print("KERNEL_OK")
</pallas_src>

<mosaic_0001>
module attributes {stable_mosaic.version = 11 : i64} {
  func.func @_fused_kernel(%arg0: memref<8x100xf32, #tpu.memory_space<vmem>>, %arg1: memref<128x256xf32, #tpu.memory_space<vmem>>, %arg2: memref<1x256xf32, #tpu.memory_space<vmem>>, %arg3: memref<256x128xf32, #tpu.memory_space<vmem>>, %arg4: memref<1x128xf32, #tpu.memory_space<vmem>>, %arg5: memref<8x128xf32, #tpu.memory_space<vmem>>, %arg6: memref<8x128xf32, #tpu.memory_space<vmem>>) attributes {dimension_semantics = [], scalar_prefetch = 0 : i64, scratch_operands = 1 : i64, tpu.core_type = #tpu.core_type<tc>} {
    %cst = arith.constant 0.000000e+00 : f32
    %0 = vector.broadcast %cst : f32 to vector<8x28xf32>
    %c0 = arith.constant 0 : index
    %c100 = arith.constant 100 : index
    %1 = vector.load %arg6[%c0, %c100] : memref<8x128xf32, #tpu.memory_space<vmem>>, vector<8x28xf32>
    tpu.vector_store %arg6[%c0, %c100], %0 {strides = array<i32>} : memref<8x128xf32, #tpu.memory_space<vmem>>, vector<8x28xf32>,
    %c0_0 = arith.constant 0 : index
    %c0_1 = arith.constant 0 : index
    %2 = vector.load %arg0[%c0_0, %c0_1] : memref<8x100xf32, #tpu.memory_space<vmem>>, vector<8x100xf32>
    %c0_2 = arith.constant 0 : index
    %c0_3 = arith.constant 0 : index
    %3 = vector.load %arg6[%c0_2, %c0_3] : memref<8x128xf32, #tpu.memory_space<vmem>>, vector<8x100xf32>
    tpu.vector_store %arg6[%c0_2, %c0_3], %2 {strides = array<i32>} : memref<8x128xf32, #tpu.memory_space<vmem>>, vector<8x100xf32>,
    %c0_4 = arith.constant 0 : index
    %c0_5 = arith.constant 0 : index
    %4 = vector.load %arg6[%c0_4, %c0_5] : memref<8x128xf32, #tpu.memory_space<vmem>>, vector<8x128xf32>
    %c0_6 = arith.constant 0 : index
    %c0_7 = arith.constant 0 : index
    %5 = vector.load %arg1[%c0_6, %c0_7] : memref<128x256xf32, #tpu.memory_space<vmem>>, vector<128x256xf32>
    %cst_8 = arith.constant dense<0.000000e+00> : vector<8x256xf32>
    %6 = tpu.matmul %4, %5, %cst_8 {dimension_numbers = #tpu.dot_dimension_numbers<[1], [0], [0], [1], [0, 0, 1, 1], [], []>} : vector<8x128xf32>, vector<128x256xf32>, vector<8x256xf32> -> vector<8x256xf32>
    %c0_9 = arith.constant 0 : index
    %c0_10 = arith.constant 0 : index
    %7 = vector.load %arg2[%c0_9, %c0_10] : memref<1x256xf32, #tpu.memory_space<vmem>>, vector<1x256xf32>
    %8 = vector.broadcast %7 : vector<1x256xf32> to vector<8x256xf32>
    %9 = arith.addf %6, %8 : vector<8x256xf32>
    %cst_11 = arith.constant 0.000000e+00 : f32
    %10 = vector.broadcast %cst_11 : f32 to vector<8x256xf32>
    %11 = arith.maximumf %9, %10 : vector<8x256xf32>
    %c0_12 = arith.constant 0 : index
    %c0_13 = arith.constant 0 : index
    %12 = vector.load %arg3[%c0_12, %c0_13] : memref<256x128xf32, #tpu.memory_space<vmem>>, vector<256x128xf32>
    %cst_14 = arith.constant dense<0.000000e+00> : vector<8x128xf32>
    %13 = tpu.matmul %11, %12, %cst_14 {dimension_numbers = #tpu.dot_dimension_numbers<[1], [0], [0], [1], [0, 0, 1, 1], [], []>} : vector<8x256xf32>, vector<256x128xf32>, vector<8x128xf32> -> vector<8x128xf32>
    %c0_15 = arith.constant 0 : index
    %c0_16 = arith.constant 0 : index
    %14 = vector.load %arg4[%c0_15, %c0_16] : memref<1x128xf32, #tpu.memory_space<vmem>>, vector<1x128xf32>
    %15 = vector.broadcast %14 : vector<1x128xf32> to vector<8x128xf32>
    %16 = arith.addf %13, %15 : vector<8x128xf32>
    %cst_17 = arith.constant dense<0xFF800000> : vector<128xf32>
    %17 = vector.multi_reduction <maximumf>, %16, %cst_17 [0] : vector<8x128xf32> to vector<128xf32>
    %18 = vector.shape_cast %17 : vector<128xf32> to vector<1x128xf32>
    %19 = vector.broadcast %18 : vector<1x128xf32> to vector<8x128xf32>
    %20 = arith.subf %16, %19 : vector<8x128xf32>
    %21 = math.exp %20 : vector<8x128xf32>
    %cst_18 = arith.constant dense<0.000000e+00> : vector<128xf32>
    %22 = vector.multi_reduction <add>, %21, %cst_18 [0] : vector<8x128xf32> to vector<128xf32>
    %23 = vector.shape_cast %22 : vector<128xf32> to vector<1x128xf32>
    %24 = vector.broadcast %23 : vector<1x128xf32> to vector<8x128xf32>
    %25 = arith.divf %21, %24 : vector<8x128xf32>
    %c0_19 = arith.constant 0 : index
    %c0_20 = arith.constant 0 : index
    %26 = vector.load %arg5[%c0_19, %c0_20] : memref<8x128xf32, #tpu.memory_space<vmem>>, vector<8x128xf32>
    tpu.vector_store %arg5[%c0_19, %c0_20], %25 {strides = array<i32>} : memref<8x128xf32, #tpu.memory_space<vmem>>, vector<8x128xf32>,
    return
  }
}

</mosaic_0001>

<llo_original>
// kernel: base_model_forward.1
$region0: #{base_model_forward.1}
  #allocation0 [shape = 'u32[]', space=smem, size = 0x4, offset = 0x4, fixed_abs, tag = 'smem constant byte address 0x4 - core index']
  #allocation1 [shape = 'u32[144,128]{1,0:T(1,128)}', space=vmem, size = 0x12000, scoped, tag = 'internal scratch']
  #allocation2 [shape = 'f32[8,128]{1,0:T(8,128)}', space=vmem, size = 0x1000, scoped, tag = 'scratch operand']
  %s0 = inlined_call_operand.hbm [shape: f32[8,100], index: 0, kind: input, shape index: {}]
  %s1 = inlined_call_operand.hbm [shape: f32[128,256], index: 1, kind: input, shape index: {}]
  %s2 = inlined_call_operand.vmem [shape: f32[1,256], index: 2, kind: input, shape index: {}]
  %s3 = inlined_call_operand.hbm [shape: f32[256,128], index: 3, kind: input, shape index: {}]
  %s4 = inlined_call_operand.vmem [shape: f32[1,128], index: 4, kind: input, shape index: {}]
  %s5 = inlined_call_operand.hbm [shape: f32[8,128], index: 5, kind: output, shape index: {}]
  %s6 = sld [smem:[#allocation0]]
  $region42: #{base_model_forward.1} parent=0
    _
  %s8 = ssub.s32 1, %s6
  %s9 = scalar_select 0, %s8, %s6
  $region1: #{base_model_forward.1} parent=0
    #allocation3 [shape = 'u8[4096]{0}', space=vmem, size = 0x1000, scoped, tag = 'input window, operand 0, single buffered']
    #allocation4 [shape = 's32[1]{0}', space=sflag, size = 0x4, scoped, tag = 'scoped memory for base_model_forward.1']
    #allocation5 [shape = 's32[1]{0}', space=sflag, size = 0x4, scoped, tag = 'scoped memory for base_model_forward.1']
    #allocation6 [shape = 'u8[131072]{0}', space=vmem, size = 0x20000, scoped, tag = 'input window, operand 1, single buffered']
    #allocation7 [shape = 's32[1]{0}', space=sflag, size = 0x4, scoped, tag = 'scoped memory for base_model_forward.1']
    #allocation8 [shape = 'u8[131072]{0}', space=vmem, size = 0x20000, scoped, tag = 'input window, operand 3, single buffered']
    #allocation9 [shape = 'u8[4096]{0}', space=vmem, size = 0x1000, scoped, tag = 'output window, operand 0, single buffered']
    %10 = vsyncpa [#allocation4], 0
    %11 = vsyncpa [#allocation7], 0
    %12 = vsyncpa [#allocation5], 0
    // Predicated region
    $region2: #{base_model_forward.1} parent=1 // pred_check
      _
    $region3: #{base_model_forward.1} parent=1 // pred_check_branch
      %14 = sbr.rel (0) target = $region5
    $region4: #{base_model_forward.1} parent=1 // pred_region
      %s16 = ssub.s32 128, 128
      %17 = vsyncadd [#allocation4], %s16
      %s19 = sshll.u32 [#allocation3], 4
      %s20 = int_to_ptr.vmem [resolvable:$true] %s19
      %22 = dma.hbm_to_vmem [thread:$0]  %s0, 128, %s20, [#allocation4]
    $region5: #{base_model_forward.1} parent=1 // pred_fallthru
      _
    // Predicated region
    $region6: #{base_model_forward.1} parent=1 // pred_check
      _
    $region7: #{base_model_forward.1} parent=1 // pred_check_branch
      %24 = sbr.rel (0) target = $region9
    $region8: #{base_model_forward.1} parent=1 // pred_region
      %s26 = ssub.s32 4096, 4096
      %27 = vsyncadd [#allocation7], %s26
      %s28 = sshll.u32 [#allocation6], 4
      %s29 = int_to_ptr.vmem [resolvable:$true] %s28
      %34 = dma.hbm_to_vmem [thread:$0]  %s1, 4096, %s29, [#allocation7], 256, 256, 16
    $region9: #{base_model_forward.1} parent=1 // pred_fallthru
      _
    // Predicated region
    $region10: #{base_model_forward.1} parent=1 // pred_check
      _
    $region11: #{base_model_forward.1} parent=1 // pred_check_branch
      %36 = sbr.rel (0) target = $region13
    $region12: #{base_model_forward.1} parent=1 // pred_region
      _
    $region13: #{base_model_forward.1} parent=1 // pred_fallthru
      _
    // Predicated region
    $region14: #{base_model_forward.1} parent=1 // pred_check
      _
    $region15: #{base_model_forward.1} parent=1 // pred_check_branch
      %38 = sbr.rel (0) target = $region17
    $region16: #{base_model_forward.1} parent=1 // pred_region
      %s40 = ssub.s32 4096, 4096
      %41 = vsyncadd [#allocation7], %s40
      %s42 = sshll.u32 [#allocation8], 4
      %s43 = int_to_ptr.vmem [resolvable:$true] %s42
      %48 = dma.hbm_to_vmem [thread:$0]  %s3, 4096, %s43, [#allocation7], 128, 128, 8
    $region17: #{base_model_forward.1} parent=1 // pred_fallthru
      _
    // Predicated region
    $region18: #{base_model_forward.1} parent=1 // pred_check
      _
    $region19: #{base_model_forward.1} parent=1 // pred_check_branch
      %50 = sbr.rel (0) target = $region21
    $region20: #{base_model_forward.1} parent=1 // pred_region
      _
    $region21: #{base_model_forward.1} parent=1 // pred_fallthru
      _
    // Predicated region
    $region22: #{base_model_forward.1} parent=1 // pred_check
      _
    $region23: #{base_model_forward.1} parent=1 // pred_check_branch
      %52 = sbr.rel (0) target = $region25
    $region24: #{base_model_forward.1} parent=1 // pred_region
      %53 = dma.done [#allocation4], 128
    $region25: #{base_model_forward.1} parent=1 // pred_fallthru
      _
    // Predicated region
    $region26: #{base_model_forward.1} parent=1 // pred_check
      _
    $region27: #{base_model_forward.1} parent=1 // pred_check_branch
      %55 = sbr.rel (0) target = $region29
    $region28: #{base_model_forward.1} parent=1 // pred_region
      %56 = dma.done [#allocation7], 4096
    $region29: #{base_model_forward.1} parent=1 // pred_fallthru
      _
    // Predicated region
    $region30: #{base_model_forward.1} parent=1 // pred_check
      _
    $region31: #{base_model_forward.1} parent=1 // pred_check_branch
      %58 = sbr.rel (0) target = $region33
    $region32: #{base_model_forward.1} parent=1 // pred_region
      %59 = dma.done [#allocation7], 4096
    $region33: #{base_model_forward.1} parent=1 // pred_fallthru
      _
    %vm60 = vcmask 1048352
    %61 = vst.msk [vmem:[#allocation2] sm:$0xff] %vm60, 0.0
    %v62 = vld [vmem:[#allocation3] sm:$0xff]
    %vm63 = vcmask 818176
    %64 = vst.msk [vmem:[#allocation2] sm:$0xff] %vm63, %v62
    %v65 = vld [vmem:[#allocation2] sm:$0xff]
    %v66 = vld [vmem:[#allocation6] sm:$0xff]
    %v67 = vld [vmem:[#allocation6 + $0x8] sm:$0xff]
    %v68 = vld [vmem:[#allocation6 + $0x10] sm:$0xff]
    %v69 = vld [vmem:[#allocation6 + $0x18] sm:$0xff]
    %v70 = vld [vmem:[#allocation6 + $0x20] sm:$0xff]
    %v71 = vld [vmem:[#allocation6 + $0x28] sm:$0xff]
    %v72 = vld [vmem:[#allocation6 + $0x30] sm:$0xff]
    %v73 = vld [vmem:[#allocation6 + $0x38] sm:$0xff]
    %v74 = vld [vmem:[#allocation6 + $0x40] sm:$0xff]
    %v75 = vld [vmem:[#allocation6 + $0x48] sm:$0xff]
    %v76 = vld [vmem:[#allocation6 + $0x50] sm:$0xff]
    %v77 = vld [vmem:[#allocation6 + $0x58] sm:$0xff]
    %v78 = vld [vmem:[#allocation6 + $0x60] sm:$0xff]
    %v79 = vld [vmem:[#allocation6 + $0x68] sm:$0xff]
    %v80 = vld [vmem:[#allocation6 + $0x70] sm:$0xff]
    %v81 = vld [vmem:[#allocation6 + $0x78] sm:$0xff]
    %v82 = vld [vmem:[#allocation6 + $0x80] sm:$0xff]
    %v83 = vld [vmem:[#allocation6 + $0x88] sm:$0xff]
    %v84 = vld [vmem:[#allocation6 + $0x90] sm:$0xff]
    %v85 = vld [vmem:[#allocation6 + $0x98] sm:$0xff]
    %v86 = vld [vmem:[#allocation6 + $0xa0] sm:$0xff]
    %v87 = vld [vmem:[#allocation6 + $0xa8] sm:$0xff]
    %v88 = vld [vmem:[#allocation6 + $0xb0] sm:$0xff]
    %v89 = vld [vmem:[#allocation6 + $0xb8] sm:$0xff]
    %v90 = vld [vmem:[#allocation6 + $0xc0] sm:$0xff]
    %v91 = vld [vmem:[#allocation6 + $0xc8] sm:$0xff]
    %v92 = vld [vmem:[#allocation6 + $0xd0] sm:$0xff]
    %v93 = vld [vmem:[#allocation6 + $0xd8] sm:$0xff]
    %v94 = vld [vmem:[#allocation6 + $0xe0] sm:$0xff]
    %v95 = vld [vmem:[#allocation6 + $0xe8] sm:$0xff]
    %v96 = vld [vmem:[#allocation6 + $0xf0] sm:$0xff]
    %v97 = vld [vmem:[#allocation6 + $0xf8] sm:$0xff]
    %v98 = vld [vmem:[%s2] sm:$0x3]
    %v100 = vlaneseq
    %v101 = vshrl.u32 %v100, 7
    %v102 = vsub.s32 0, %v101
    %v103 = vrot.slane %v98, %v102
    %v104 = vlaneseq
    %v105 = vshrl.u32 %v104, 7
    %v106 = vsub.s32 1, %v105
    %v107 = vrot.slane %v98, %v106
    %110 = vmatprep.subr.mxu0 %v67
    %111 = vmatpush1.msra.mxu0 %v66
    %112 = vmatprep.subr.mxu0 %v69
    %113 = vmatpush1.msra.mxu0 %v68
    %114 = vmatprep.subr.mxu0 %v71
    %115 = vmatpush1.msra.mxu0 %v70
    %116 = vmatprep.subr.mxu0 %v73
    %117 = vmatpush1.msra.mxu0 %v72
    %118 = vmatprep.subr.mxu0 %v75
    %119 = vmatpush1.msra.mxu0 %v74
    %120 = vmatprep.subr.mxu0 %v77
    %121 = vmatpush1.msra.mxu0 %v76
    %122 = vmatprep.subr.mxu0 %v79
    %123 = vmatpush1.msra.mxu0 %v78
    %124 = vmatprep.subr.mxu0 %v81
    %125 = vmatpush1.msra.mxu0 %v80
    %126 = vmatprep.subr.mxu0 %v83
    %127 = vmatpush1.msra.mxu0 %v82
    %128 = vmatprep.subr.mxu0 %v85
    %129 = vmatpush1.msra.mxu0 %v84
    %130 = vmatprep.subr.mxu0 %v87
    %131 = vmatpush1.msra.mxu0 %v86
    %132 = vmatprep.subr.mxu0 %v89
    %133 = vmatpush1.msra.mxu0 %v88
    %134 = vmatprep.subr.mxu0 %v91
    %135 = vmatpush1.msra.mxu0 %v90
    %136 = vmatprep.subr.mxu0 %v93
    %137 = vmatpush1.msra.mxu0 %v92
    %138 = vmatprep.subr.mxu0 %v95
    %139 = vmatpush1.msra.mxu0 %v94
    %140 = vmatprep.subr.mxu0 %v97
    %141 = vmatpush1.msra.mxu0 %v96
    %142 = vmatprep.subr.mxu0 0.0
    %143 = vmatpush1.msra.mxu0 0.0
    %144 = vmatprep.subr.mxu0 0.0
    %145 = vmatpush1.msra.mxu0 0.0
    %146 = vmatprep.subr.mxu0 0.0
    %147 = vmatpush1.msra.mxu0 0.0
    %148 = vmatprep.subr.mxu0 0.0
    %149 = vmatpush1.msra.mxu0 0.0
    %150 = vmatprep.subr.mxu0 0.0
    %151 = vmatpush1.msra.mxu0 0.0
    %152 = vmatprep.subr.mxu0 0.0
    %153 = vmatpush1.msra.mxu0 0.0
    %154 = vmatprep.subr.mxu0 0.0
    %155 = vmatpush1.msra.mxu0 0.0
    %156 = vmatprep.subr.mxu0 0.0
    %157 = vmatpush1.msra.mxu0 0.0
    %158 = vmatprep.subr.mxu0 0.0
    %159 = vmatpush1.msra.mxu0 0.0
    %160 = vmatprep.subr.mxu0 0.0
    %161 = vmatpush1.msra.mxu0 0.0
    %162 = vmatprep.subr.mxu0 0.0
    %163 = vmatpush1.msra.mxu0 0.0
    %164 = vmatprep.subr.mxu0 0.0
    %165 = vmatpush1.msra.mxu0 0.0
    %166 = vmatprep.subr.mxu0 0.0
    %167 = vmatpush1.msra.mxu0 0.0
    %168 = vmatprep.subr.mxu0 0.0
    %169 = vmatpush1.msra.mxu0 0.0
    %170 = vmatprep.subr.mxu0 0.0
    %171 = vmatpush1.msra.mxu0 0.0
    %172 = vmatprep.subr.mxu0 0.0
    %173 = vmatpush1.msra.mxu0 0.0
    %174 = vmatprep.mubr.f32.mxu0 0.0
    %175 = vmatmul.mubr.f32.gmra.mrb[0].mxu0 %v65
    %v176 = vpop.f32.mrb[0].mxu0
    %v177 = vadd.f32 %v103, %v176
    %v178 = vpop.f32.mrb[0].mxu0
    %v179 = vadd.f32 %v107, %v178
    %180 = vdwg.mxu0
    %v181 = vmax.f32 %v177, 0.0
    %v182 = vmax.f32 %v179, 0.0
    %v183 = vld [vmem:[#allocation8] sm:$0xff]
    %v184 = vld [vmem:[#allocation8 + $0x8] sm:$0xff]
    %v185 = vld [vmem:[#allocation8 + $0x10] sm:$0xff]
    %v186 = vld [vmem:[#allocation8 + $0x18] sm:$0xff]
    %v187 = vld [vmem:[#allocation8 + $0x20] sm:$0xff]
    %v188 = vld [vmem:[#allocation8 + $0x28] sm:$0xff]
    %v189 = vld [vmem:[#allocation8 + $0x30] sm:$0xff]
    %v190 = vld [vmem:[#allocation8 + $0x38] sm:$0xff]
    %v191 = vld [vmem:[#allocation8 + $0x40] sm:$0xff]
    %v192 = vld [vmem:[#allocation8 + $0x48] sm:$0xff]
    %v193 = vld [vmem:[#allocation8 + $0x50] sm:$0xff]
    %v194 = vld [vmem:[#allocation8 + $0x58] sm:$0xff]
    %v195 = vld [vmem:[#allocation8 + $0x60] sm:$0xff]
    %v196 = vld [vmem:[#allocation8 + $0x68] sm:$0xff]
    %v197 = vld [vmem:[#allocation8 + $0x70] sm:$0xff]
    %v198 = vld [vmem:[#allocation8 + $0x78] sm:$0xff]
    %v199 = vld [vmem:[#allocation8 + $0x80] sm:$0xff]
    %v200 = vld [vmem:[#allocation8 + $0x88] sm:$0xff]
    %v201 = vld [vmem:[#allocation8 + $0x90] sm:$0xff]
    %v202 = vld [vmem:[#allocation8 + $0x98] sm:$0xff]
    %v203 = vld [vmem:[#allocation8 + $0xa0] sm:$0xff]
    %v204 = vld [vmem:[#allocation8 + $0xa8] sm:$0xff]
    %v205 = vld [vmem:[#allocation8 + $0xb0] sm:$0xff]
    %v206 = vld [vmem:[#allocation8 + $0xb8] sm:$0xff]
    %v207 = vld [vmem:[#allocation8 + $0xc0] sm:$0xff]
    %v208 = vld [vmem:[#allocation8 + $0xc8] sm:$0xff]
    %v209 = vld [vmem:[#allocation8 + $0xd0] sm:$0xff]
    %v210 = vld [vmem:[#allocation8 + $0xd8] sm:$0xff]
    %v211 = vld [vmem:[#allocation8 + $0xe0] sm:$0xff]
    %v212 = vld [vmem:[#allocation8 + $0xe8] sm:$0xff]
    %v213 = vld [vmem:[#allocation8 + $0xf0] sm:$0xff]
    %v214 = vld [vmem:[#allocation8 + $0xf8] sm:$0xff]
    %v215 = vld [vmem:[%s4] sm:$0x1]
    %v217 = vlaneseq
    %v218 = vshrl.u32 %v217, 7
    %v219 = vsub.s32 0, %v218
    %v220 = vrot.slane %v215, %v219
    %222 = vmatprep.subr.mxu0 0.0
    %223 = vmatpush1.msra.mxu0 %v183
    %224 = vmatprep.subr.mxu0 0.0
    %225 = vmatpush1.msra.mxu0 %v184
    %226 = vmatprep.subr.mxu0 0.0
    %227 = vmatpush1.msra.mxu0 %v185
    %228 = vmatprep.subr.mxu0 0.0
    %229 = vmatpush1.msra.mxu0 %v186
    %230 = vmatprep.subr.mxu0 0.0
    %231 = vmatpush1.msra.mxu0 %v187
    %232 = vmatprep.subr.mxu0 0.0
    %233 = vmatpush1.msra.mxu0 %v188
    %234 = vmatprep.subr.mxu0 0.0
    %235 = vmatpush1.msra.mxu0 %v189
    %236 = vmatprep.subr.mxu0 0.0
    %237 = vmatpush1.msra.mxu0 %v190
    %238 = vmatprep.subr.mxu0 0.0
    %239 = vmatpush1.msra.mxu0 %v191
    %240 = vmatprep.subr.mxu0 0.0
    %241 = vmatpush1.msra.mxu0 %v192
    %242 = vmatprep.subr.mxu0 0.0
    %243 = vmatpush1.msra.mxu0 %v193
    %244 = vmatprep.subr.mxu0 0.0
    %245 = vmatpush1.msra.mxu0 %v194
    %246 = vmatprep.subr.mxu0 0.0
    %247 = vmatpush1.msra.mxu0 %v195
    %248 = vmatprep.subr.mxu0 0.0
    %249 = vmatpush1.msra.mxu0 %v196
    %250 = vmatprep.subr.mxu0 0.0
    %251 = vmatpush1.msra.mxu0 %v197
    %252 = vmatprep.subr.mxu0 0.0
    %253 = vmatpush1.msra.mxu0 %v198
    %254 = vmatprep.subr.mxu0 0.0
    %255 = vmatpush1.msra.mxu0 %v199
    %256 = vmatprep.subr.mxu0 0.0
    %257 = vmatpush1.msra.mxu0 %v200
    %258 = vmatprep.subr.mxu0 0.0
    %259 = vmatpush1.msra.mxu0 %v201
    %260 = vmatprep.subr.mxu0 0.0
    %261 = vmatpush1.msra.mxu0 %v202
    %262 = vmatprep.subr.mxu0 0.0
    %263 = vmatpush1.msra.mxu0 %v203
    %264 = vmatprep.subr.mxu0 0.0
    %265 = vmatpush1.msra.mxu0 %v204
    %266 = vmatprep.subr.mxu0 0.0
    %267 = vmatpush1.msra.mxu0 %v205
    %268 = vmatprep.subr.mxu0 0.0
    %269 = vmatpush1.msra.mxu0 %v206
    %270 = vmatprep.subr.mxu0 0.0
    %271 = vmatpush1.msra.mxu0 %v207
    %272 = vmatprep.subr.mxu0 0.0
    %273 = vmatpush1.msra.mxu0 %v208
    %274 = vmatprep.subr.mxu0 0.0
    %275 = vmatpush1.msra.mxu0 %v209
    %276 = vmatprep.subr.mxu0 0.0
    %277 = vmatpush1.msra.mxu0 %v210
    %278 = vmatprep.subr.mxu0 0.0
    %279 = vmatpush1.msra.mxu0 %v211
    %280 = vmatprep.subr.mxu0 0.0
    %281 = vmatpush1.msra.mxu0 %v212
    %282 = vmatprep.subr.mxu0 0.0
    %283 = vmatpush1.msra.mxu0 %v213
    %284 = vmatprep.subr.mxu0 0.0
    %285 = vmatpush1.msra.mxu0 %v214
    %286 = vmatprep.mubr.f32.mxu0 %v182
    %287 = vmatmul.mubr.f32.gmra.mrb[0].mxu0 %v181
    %v288 = vpop.f32.mrb[0].mxu0
    %v289 = vadd.f32 %v220, %v288
    %v290 = vpop.f32.mrb[0].mxu0
    %291 = vdwg.mxu0
    %v292 = vrot.slane %v289, 4
    %v293 = vmax.f32 %v289, %v292
    %v294 = vrot.slane %v293, 2
    %v295 = vmax.f32 %v293, %v294
    %v296 = vrot.slane %v295, 1
    %v297 = vmax.f32 %v295, %v296
    %v298 = vsub.f32 %v289, %v297
    %v299 = vmul.f32 %v298, 1.442695
    %v300 = vpow.pop %v299
    %v301 = vrot.slane %v300, 4
    %v302 = vadd.f32 %v300, %v301
    %v303 = vrot.slane %v302, 2
    %v304 = vadd.f32 %v302, %v303
    %v305 = vrot.slane %v304, 1
    %v306 = vadd.f32 %v304, %v305
    %v307 = vrcp.pop %v306
    %v308 = vmul.f32 %v300, %v307
    %309 = vst [vmem:[#allocation9] sm:$0xff] %v308
    // Predicated region
    $region34: #{base_model_forward.1} parent=1 // pred_check
      _
    $region35: #{base_model_forward.1} parent=1 // pred_check_branch
      %311 = sbr.rel (0) target = $region37
    $region36: #{base_model_forward.1} parent=1 // pred_region
      %s313 = ssub.s32 128, 128
      %314 = vsyncadd [#allocation5], %s313
      %s316 = sshll.u32 [#allocation9], 4
      %s317 = int_to_ptr.vmem [resolvable:$true] %s316
      %319 = dma.vmem_to_hbm [thread:$0]  %s317, 128, %s5, [#allocation5]
    $region37: #{base_model_forward.1} parent=1 // pred_fallthru
      _
    // Predicated region
    $region38: #{base_model_forward.1} parent=1 // pred_check
      _
    $region39: #{base_model_forward.1} parent=1 // pred_check_branch
      %321 = sbr.rel (0) target = $region41
    $region40: #{base_model_forward.1} parent=1 // pred_region
      %322 = dma.done [#allocation5], 128
    $region41: #{base_model_forward.1} parent=1 // pred_fallthru
      _
    %323 = vsyncpa [#allocation4], 1
    %324 = vsyncpa [#allocation7], 1
    %325 = vsyncpa [#allocation5], 1

</llo_original>
